<compile_context>
chip_gen: v5e
topology: v5e:2x2
jax: 0.10.0
libtpu: 0.0.40
codegen_flags: <defaults>
</compile_context>

<pallas_src>
import functools

import jax
import jax.numpy as jnp
from jax import lax
from jax.experimental import pallas as pl
from jax.experimental.pallas import tpu as pltpu


def _round_up(x, m):
    return ((x + m - 1) // m) * m


def _vmem_limit_bytes(working_set_bytes):
    # ~1.5x headroom over the double-buffered working set; floor at 32 MiB
    # (>= default scoped limits on all generations), cap at 60 MiB so the
    # request stays below v7x's 64 MiB/TC physical VMEM.
    need = (int(working_set_bytes) * 3) // 2
    return int(min(max(need, 32 * 1024 * 1024), 60 * 1024 * 1024))


# ----------------------------------------------------------------------------
# Kernel 1: grouped expert GEMM.
#   grid = (num_blocks,): each block is `block_tokens` routed rows that all
#   belong to ONE expert; the expert id per block is a scalar-prefetch table
#   consumed by the expert-weight index_map.  Blocks are independent, so the
#   grid axis is "parallel" (megacore-friendly on v7x).
# ----------------------------------------------------------------------------
def _grouped_expert_kernel(block_expert_ref, x_ref, w_ref, gate_ref, y_ref):
    del block_expert_ref  # only used by the index_maps
    # (tm, H_in) @ (H_in, H_out) on the MXU, f32 accumulation.
    y = jnp.dot(x_ref[...], w_ref[0], preferred_element_type=jnp.float32)
    # Per-row routing weight (padding rows carry gate == 0).
    y_ref[...] = (gate_ref[...] * y).astype(y_ref.dtype)


def _grouped_expert_gemm(x_sorted, gate_sorted, block_expert, expert_w_t, *,
                         block_tokens):
    R, H_in = x_sorted.shape                       # R = num_blocks * block_tokens
    E, _, H_out = expert_w_t.shape
    num_blocks = R // block_tokens

    working_set = (2 * H_in * H_out * expert_w_t.dtype.itemsize      # weight dbuf
                   + 2 * block_tokens * H_in * x_sorted.dtype.itemsize
                   + 2 * block_tokens * H_out * 4                    # f32 out dbuf
                   + 2 * block_tokens * 128 * 4)                     # (tm,1) gate
    return pl.pallas_call(
        _grouped_expert_kernel,
        out_shape=jax.ShapeDtypeStruct((R, H_out), jnp.float32),
        grid_spec=pltpu.PrefetchScalarGridSpec(
            num_scalar_prefetch=1,                 # block -> expert id table
            grid=(num_blocks,),
            in_specs=[
                pl.BlockSpec((block_tokens, H_in), lambda b, be: (b, 0)),
                pl.BlockSpec((1, H_in, H_out), lambda b, be: (be[b], 0, 0)),
                pl.BlockSpec((block_tokens, 1), lambda b, be: (b, 0)),
            ],
            out_specs=pl.BlockSpec((block_tokens, H_out), lambda b, be: (b, 0))),
        compiler_params=pltpu.CompilerParams(
            dimension_semantics=("parallel",),
            vmem_limit_bytes=_vmem_limit_bytes(working_set)),
    )(block_expert, x_sorted, expert_w_t, gate_sorted)


@functools.partial(jax.jit, static_argnames=("top_k", "block_tokens"))
def moe_block_forward(x, router_w, expert_w_t, *, top_k, block_tokens=256):
    """OlmoeSparseMoeBlock forward.

    x:          [T, H]
    router_w:   [H, E]
    expert_w_t: [E, H_in, H_out]   (pre-transposed Linear weights)
    """
    T, H = x.shape
    E = expert_w_t.shape[0]
    H_out = expert_w_t.shape[2]
    tm = max(8, (block_tokens // 8) * 8)

    # ---- Router: logits + softmax + top-k (tiny [T,H]x[H,E]; kept in XLA).
    # TODO(synk): routing softmax/top-k and the sort/gather/scatter permutation
    # stay in XLA — only the FLOP-dominant grouped expert GEMM is a Pallas
    # kernel (standard MoE kernel decomposition).
    logits = jnp.dot(x.astype(jnp.float32), router_w.astype(jnp.float32),
                     precision=lax.Precision.HIGHEST)
    probs = jax.nn.softmax(logits, axis=-1)
    gate_vals, gate_idx = lax.top_k(probs, top_k)            # [T, top_k]
    # NOTE: OLMoE default norm_topk_prob=False -> no renormalization.

    # ---- Sort (token, expert) assignments by expert; pad each expert group to
    #      a multiple of tm so every grid block maps to exactly one expert.
    A = T * top_k
    flat_e = gate_idx.reshape(A).astype(jnp.int32)
    flat_g = gate_vals.reshape(A).astype(jnp.float32)
    flat_t = jnp.repeat(jnp.arange(T, dtype=jnp.int32), top_k)
    order = jnp.argsort(flat_e)
    sort_t = flat_t[order]
    sort_g = flat_g[order]

    group_sizes = jnp.bincount(flat_e, length=E).astype(jnp.int32)        # [E]
    group_starts = jnp.concatenate(
        [jnp.zeros((1,), jnp.int32),
         jnp.cumsum(group_sizes)[:-1].astype(jnp.int32)])
    blocks_per_group = (group_sizes + tm - 1) // tm
    block_ends = jnp.cumsum(blocks_per_group).astype(jnp.int32)
    block_starts = block_ends - blocks_per_group
    num_blocks_used = block_ends[-1]

    # Static upper bound on padded blocks: cdiv(A, tm) + E.
    # TODO(synk): padding blocks beyond num_blocks_used still run (gate == 0,
    # so they only waste work); production should prune them or shrink tm.
    NB = (A + tm - 1) // tm + E
    blk = jnp.arange(NB, dtype=jnp.int32)
    block_expert = jnp.minimum(
        jnp.searchsorted(block_ends, blk, side="right").astype(jnp.int32), E - 1)

    row = jnp.arange(NB * tm, dtype=jnp.int32)
    row_block = row // tm
    row_expert = block_expert[row_block]
    local = (row_block - block_starts[row_expert]) * tm + row % tm
    valid = (local < group_sizes[row_expert]) & (row_block < num_blocks_used)
    src = jnp.where(valid, group_starts[row_expert] + local, 0)
    token_idx = jnp.where(valid, sort_t[src], 0)
    gate = jnp.where(valid, sort_g[src], 0.0)

    x_sorted = jnp.take(x, token_idx, axis=0)                 # [NB*tm, H]
    y_sorted = _grouped_expert_gemm(x_sorted, gate.reshape(-1, 1),
                                    block_expert, expert_w_t, block_tokens=tm)

    # Combine the top_k expert outputs per token (padding rows add zeros).
    out = jnp.zeros((T, H_out), jnp.float32).at[token_idx].add(y_sorted)
    return out.astype(x.dtype)


# ----------------------------------------------------------------------------
# Kernel 2: pairwise expert-weight similarity (the forward-hook hot path)
#   cosine[i, j] = <w_i, w_j> / (||w_i|| * ||w_j||)
#   l2[i, j]     = ||w_i - w_j||_2
# Flattened-weight dim D is a grid reduction axis; the Gram accumulates in a
# VMEM f32 scratch; cos/l2 finalize under pl.when(last).
# ----------------------------------------------------------------------------
def _expert_similarity_kernel(w_ref, cos_ref, l2_ref, gram_ref):
    k = pl.program_id(0)

    @pl.when(k == 0)
    def _():
        gram_ref[...] = jnp.zeros_like(gram_ref)

    w = w_ref[...]                                                      # [E, tk]
    gram_ref[...] += lax.dot_general(w, w, (((1,), (1,)), ((), ())),
                                     preferred_element_type=jnp.float32)

    @pl.when(k == pl.num_programs(0) - 1)
    def _():
        g = gram_ref[...]                                               # [E, E]
        r = lax.broadcasted_iota(jnp.int32, g.shape, 0)
        c = lax.broadcasted_iota(jnp.int32, g.shape, 1)
        diag = jnp.where(r == c, g, 0.0)
        sq_col = jnp.sum(diag, axis=1, keepdims=True)                   # ||w_i||^2
        sq_row = jnp.sum(diag, axis=0, keepdims=True)
        norm_col = jnp.maximum(jnp.sqrt(sq_col), 1e-8)
        norm_row = jnp.maximum(jnp.sqrt(sq_row), 1e-8)
        cos_ref[...] = g / (norm_col * norm_row)
        # TODO(synk): L2 from the Gram suffers cancellation for near-identical
        # experts; use a dedicated difference pass if tiny distances matter.
        l2_ref[...] = jnp.sqrt(jnp.maximum(sq_col + sq_row - 2.0 * g, 0.0))


@functools.partial(jax.jit, static_argnames=("max_d_tile",))
def expert_weight_similarity(expert_w, *, max_d_tile=32768):
    E = expert_w.shape[0]
    w_flat = expert_w.reshape(E, -1)            # glue reshape outside the kernel
    D = w_flat.shape[1]
    tk = min(_round_up(D, 128), max(128, (max_d_tile // 128) * 128))
    Dp = _round_up(D, tk)
    if Dp != D:
        w_flat = jnp.pad(w_flat, ((0, 0), (0, Dp - D)))   # zeros don't change Gram

    working_set = 2 * E * tk * w_flat.dtype.itemsize + 3 * E * max(E, 128) * 4
    cos, l2 = pl.pallas_call(
        _expert_similarity_kernel,
        out_shape=(jax.ShapeDtypeStruct((E, E), jnp.float32),
                   jax.ShapeDtypeStruct((E, E), jnp.float32)),
        grid_spec=pltpu.PrefetchScalarGridSpec(
            num_scalar_prefetch=0,
            grid=(Dp // tk,),
            in_specs=[pl.BlockSpec((E, tk), lambda k: (0, k))],
            out_specs=(pl.BlockSpec((E, E), lambda k: (0, 0)),
                       pl.BlockSpec((E, E), lambda k: (0, 0))),
            scratch_shapes=[pltpu.VMEM((E, E), jnp.float32)]),
        compiler_params=pltpu.CompilerParams(
            dimension_semantics=("arbitrary",),
            vmem_limit_bytes=_vmem_limit_bytes(working_set)),
    )(w_flat)
    return cos, l2


# ----------------------------------------------------------------------------
# Wrapper mirroring OlmoeSimilarityWrapper (hooks -> explicit calls in JAX)
# ----------------------------------------------------------------------------
class OlmoeSimilarityWrapperJAX:
    """params: dict layer_name -> (router_w [H, E], expert_w [E, H_out, H_in])."""

    def __init__(self, params, top_k, block_tokens=256):
        self.params = params
        self.top_k = top_k
        self.block_tokens = block_tokens
        self.expert_weight_similarity_sum = {}
        self.expert_weight_similarity_count = {}
        self._similarity_cache = {}
        # Pre-transpose Linear weights once to [E, H_in, H_out] (MXU-natural rhs).
        self._expert_w_t = {name: jnp.swapaxes(w, 1, 2)
                            for name, (_, w) in params.items()}

    def reset_counts(self):
        self.expert_weight_similarity_sum = {}
        self.expert_weight_similarity_count = {}

    def __call__(self, hidden_states):
        shape = hidden_states.shape
        out = hidden_states.reshape(-1, shape[-1])
        for name, (router_w, expert_w) in self.params.items():
            out = moe_block_forward(out, router_w, self._expert_w_t[name],
                                    top_k=self.top_k,
                                    block_tokens=self.block_tokens)
            # "forward hook": expert weights are constant across forward calls,
            # so the O(E^2 * D) Gram is computed once per layer and cached
            # (the PyTorch hook recomputes identical matrices every call).
            if name not in self._similarity_cache:
                self._similarity_cache[name] = expert_weight_similarity(expert_w)
            cos, l2 = self._similarity_cache[name]
            if name not in self.expert_weight_similarity_sum:
                E = expert_w.shape[0]
                self.expert_weight_similarity_sum[name] = {
                    "cosine": jnp.zeros((E, E), jnp.float32),
                    "l2": jnp.zeros((E, E), jnp.float32),
                }
                self.expert_weight_similarity_count[name] = 0
            self.expert_weight_similarity_sum[name]["cosine"] += cos
            self.expert_weight_similarity_sum[name]["l2"] += l2
            self.expert_weight_similarity_count[name] += 1
        return out.reshape(shape)

    def compute_similarity(self):
        result = {}
        for layer, sums in self.expert_weight_similarity_sum.items():
            count = self.expert_weight_similarity_count[layer]
            result[layer] = {
                "cosine": (sums["cosine"] / count).tolist(),
                "l2": (sums["l2"] / count).tolist(),
            }
        return result


# ----------------------------------------------------------------------------
# Pure-JAX references (correctness check only)
# ----------------------------------------------------------------------------
def _moe_ref(x, router_w, expert_w, top_k):
    E = expert_w.shape[0]
    probs = jax.nn.softmax(
        jnp.dot(x, router_w, precision=lax.Precision.HIGHEST), axis=-1)
    vals, idx = lax.top_k(probs, top_k)
    routing = jnp.sum(jax.nn.one_hot(idx, E, dtype=probs.dtype) * vals[..., None],
                      axis=1)                                            # [T, E]
    y_all = jnp.einsum("th,eoh->teo", x, expert_w,
                       precision=lax.Precision.HIGHEST)                  # [T, E, H]
    return jnp.sum(routing[..., None] * y_all, axis=1)


def _sim_ref(expert_w):
    E = expert_w.shape[0]
    wf = expert_w.reshape(E, -1).astype(jnp.float32)
    norms = jnp.linalg.norm(wf, axis=-1)
    gram = jnp.dot(wf, wf.T, precision=lax.Precision.HIGHEST)
    cos = gram / jnp.maximum(norms[:, None] * norms[None, :], 1e-8)
    l2 = jnp.linalg.norm(wf[:, None, :] - wf[None, :, :], axis=-1)
    return cos, l2


# ----------------------------------------------------------------------------
if __name__ == "__main__":
    # Small, module-consistent shapes: token-major hidden states through an
    # MoE block with Linear experts.
    batch, seq, hidden = 2, 32, 128
    num_experts, top_k = 8, 2
    T = batch * seq

    key = jax.random.PRNGKey(0)
    kx, kr, ke = jax.random.split(key, 3)
    x = jax.random.normal(kx, (T, hidden), jnp.float32)
    router_w = jax.random.normal(kr, (hidden, num_experts), jnp.float32) * 0.02
    # TODO(synk): real OLMoE experts are gate/up/down SwiGLU MLPs; the hook's
    # `expert.weight` only exists for Linear-style experts, so experts are
    # modeled as Linear(hidden, hidden, bias=False) here.
    expert_w = jax.random.normal(ke, (num_experts, hidden, hidden), jnp.float32) * 0.02

    layer_name = "model.layers.0.mlp"
    params = {layer_name: (router_w, expert_w)}
    # block_tokens=16: T*top_k=128 routed rows over 8 experts -> several blocks
    # per expert plus padding blocks, exercising the grouped-GEMM path.
    wrapper = OlmoeSimilarityWrapperJAX(params, top_k=top_k, block_tokens=16)

    out1 = wrapper(x)
    out2 = wrapper(x)          # second call hits the cached-similarity path
    out2 = jax.block_until_ready(out2)

    ref_out = _moe_ref(x, router_w, expert_w, top_k)
    ref_cos, ref_l2 = _sim_ref(expert_w)

    assert jnp.allclose(out1, ref_out, atol=5e-3, rtol=5e-3), "MoE forward mismatch"
    assert jnp.allclose(out2, ref_out, atol=5e-3, rtol=5e-3), "MoE forward mismatch (call 2)"
    assert wrapper.expert_weight_similarity_count[layer_name] == 2

    sims = wrapper.compute_similarity()
    cos_avg = jnp.asarray(sims[layer_name]["cosine"], jnp.float32)
    l2_avg = jnp.asarray(sims[layer_name]["l2"], jnp.float32)
    assert jnp.allclose(cos_avg, ref_cos, atol=1e-3, rtol=1e-3), "cosine mismatch"
    assert jnp.allclose(l2_avg, ref_l2, atol=3e-3, rtol=1e-3), "l2 mismatch"

    print("KERNEL_OK")
</pallas_src>

<mosaic_0001>
module attributes {stable_mosaic.version = 11 : i64} {
  func.func @_grouped_expert_kernel(%arg0: i32, %arg1: memref<16xi32, #tpu.memory_space<smem>>, %arg2: memref<16x128xf32, #tpu.memory_space<vmem>>, %arg3: memref<1x128x128xf32, #tpu.memory_space<vmem>>, %arg4: memref<16x1xf32, #tpu.memory_space<vmem>>, %arg5: memref<16x128xf32, #tpu.memory_space<vmem>>) attributes {dimension_semantics = [#tpu.dimension_semantics<parallel>], iteration_bounds = array<i64: 16>, scalar_prefetch = 1 : i64, scratch_operands = 0 : i64, tpu.core_type = #tpu.core_type<tc>, window_params = [{transform_indices = @transform_0, window_bounds = array<i64: 16, 128>}, {transform_indices = @transform_1, window_bounds = array<i64: 1, 128, 128>}, {transform_indices = @transform_2, window_bounds = array<i64: 16, 1>}, {transform_indices = @transform_3, window_bounds = array<i64: 16, 128>}]} {
    %c0 = arith.constant 0 : index
    %c0_0 = arith.constant 0 : index
    %0 = vector.load %arg2[%c0, %c0_0] : memref<16x128xf32, #tpu.memory_space<vmem>>, vector<16x128xf32>
    %c0_1 = arith.constant 0 : index
    %c0_2 = arith.constant 0 : index
    %c0_3 = arith.constant 0 : index
    %1 = vector.load %arg3[%c0_1, %c0_2, %c0_3] : memref<1x128x128xf32, #tpu.memory_space<vmem>>, vector<1x128x128xf32>
    %2 = vector.shape_cast %1 : vector<1x128x128xf32> to vector<128x128xf32>
    %cst = arith.constant dense<0.000000e+00> : vector<16x128xf32>
    %3 = tpu.matmul %0, %2, %cst {dimension_numbers = #tpu.dot_dimension_numbers<[1], [0], [0], [1], [0, 0, 1, 1], [], []>} : vector<16x128xf32>, vector<128x128xf32>, vector<16x128xf32> -> vector<16x128xf32>
    %c0_4 = arith.constant 0 : index
    %c0_5 = arith.constant 0 : index
    %4 = vector.load %arg4[%c0_4, %c0_5] : memref<16x1xf32, #tpu.memory_space<vmem>>, vector<16x1xf32>
    %5 = vector.broadcast %4 : vector<16x1xf32> to vector<16x128xf32>
    %6 = arith.mulf %5, %3 : vector<16x128xf32>
    %c0_6 = arith.constant 0 : index
    %c0_7 = arith.constant 0 : index
    %7 = vector.load %arg5[%c0_6, %c0_7] : memref<16x128xf32, #tpu.memory_space<vmem>>, vector<16x128xf32>
    tpu.vector_store %arg5[%c0_6, %c0_7], %6 {strides = array<i32>} : memref<16x128xf32, #tpu.memory_space<vmem>>, vector<16x128xf32>,
    return
  }
  func.func @transform_0(%arg0: i32, %arg1: memref<16xi32, #tpu.memory_space<smem>>) -> (i32, i32) {
    %c0_i32 = arith.constant 0 : i32
    %c0_i32_0 = arith.constant 0 : i32
    return %arg0, %c0_i32 : i32, i32
  }
  func.func @transform_1(%arg0: i32, %arg1: memref<16xi32, #tpu.memory_space<smem>>) -> (i32, i32, i32) {
    %0 = arith.index_cast %arg0 : i32 to index
    %1 = memref.load %arg1[%0] : memref<16xi32, #tpu.memory_space<smem>>
    %c0_i32 = arith.constant 0 : i32
    %c0_i32_0 = arith.constant 0 : i32
    %c0_i32_1 = arith.constant 0 : i32
    return %1, %c0_i32, %c0_i32_0 : i32, i32, i32
  }
  func.func @transform_2(%arg0: i32, %arg1: memref<16xi32, #tpu.memory_space<smem>>) -> (i32, i32) {
    %c0_i32 = arith.constant 0 : i32
    %c0_i32_0 = arith.constant 0 : i32
    return %arg0, %c0_i32 : i32, i32
  }
  func.func @transform_3(%arg0: i32, %arg1: memref<16xi32, #tpu.memory_space<smem>>) -> (i32, i32) {
    %c0_i32 = arith.constant 0 : i32
    %c0_i32_0 = arith.constant 0 : i32
    return %arg0, %c0_i32 : i32, i32
  }
}

</mosaic_0001>

<llo_original>
// kernel: custom-call.1
$region0: #{custom-call.1}
  %s0 = inlined_call_operand.vmem [shape: u32[16], index: 0, kind: output, shape index: {}]

// kernel: moe_block_forward.1
$region0: #{moe_block_forward.1}
  #allocation0 [shape = 'u32[]', space=smem, size = 0x4, offset = 0x4, fixed_abs, tag = 'smem constant byte address 0x4 - core index']
  #allocation1 [shape = 'u32[72,128]{1,0:T(1,128)}', space=vmem, size = 0x9000, scoped, tag = 'internal scratch']
  #allocation2 [shape = 's32[1]{0}', space=sflag, size = 0x4, scoped, tag = 'scoped memory for moe_block_forward.1']
  #allocation3 [shape = 'u8[512]{0}', space=smem, size = 0x200, scoped, tag = 'prefetched SMEM operand 0']
  %s0 = inlined_call_operand.vmem [shape: s32[16], index: 0, kind: input, shape index: {}]
  %s1 = inlined_call_operand.vmem [shape: f32[256,128], index: 1, kind: input, shape index: {}]
  %s2 = inlined_call_operand.vmem [shape: f32[8,128,128], index: 2, kind: input, shape index: {}]
  %s3 = inlined_call_operand.vmem [shape: f32[256,1], index: 3, kind: input, shape index: {}]
  %s4 = inlined_call_operand.vmem [shape: f32[256,128], index: 4, kind: output, shape index: {}]
  %s5 = sld [smem:[#allocation0]]
  $region45: #{moe_block_forward.1} parent=0
    _
  %s7 = ssub.s32 1, %s5
  %s8 = scalar_select 0, %s7, %s5
  %s10 = sshll.u32 %s0, 4
  %s11 = int_to_ptr.vmem [resolvable:$true] %s10
  %13 = dma.vmem_to_smem %s11, 16, [#allocation3], [#allocation2]
  %15 = dma.done [#allocation2], 16
  %16 = sfence
  loop: start=0, step=1, limit=18
  $region2: #{moe_block_forward.1} parent=0 // loop_pre_header
    _
  $region3: #{moe_block_forward.1} parent=0 // loop_header
    %s18 = sphi 0, %s22
    %p19 = scmp.ge.s32.totalorder %s18, 18
    %s28 = sphi 0, %s30
    %s31 = sphi 0, %s28
    %s32 = sphi 0, %s31
    %s48 = sphi 0, %s32
    %s56 = sphi 0, %s58
    %s59 = sphi 0, %s56
    %s60 = sphi 0, %s59
    %s76 = sphi 0, %s60
    %s82 = sphi 0, %s84
    %s85 = sphi 0, %s82
    %s86 = sphi 0, %s85
    %s102 = sphi 0, %s86
    %s108 = sphi 0, %s110
    %s111 = sphi 0, %s108
    %s112 = sphi 0, %s111
    %s128 = sphi 0, %s112
  $region4: #{moe_block_forward.1} parent=0 // loop_header_branch
    %21 = sbr.rel (%p19) target = $region8
  $region5: #{moe_block_forward.1} parent=0 // loop_body
    %s23 = ssub.s32 %s18, 1
    %s24 = ssub.s32 %s18, 2
    %s25 = sadd.s32 %s18, 1
    %s26 = ssub.s32 %s18, %s25
    %p27 = scmp.eq.s32.totalorder %s26, 0
    %s29 = sadd.s32 %s28, 1
    %s30 = scalar_select %p27, %s28, %s29
    %p33 = pneg %p27
    %p34 = scmp.eq.s32.totalorder %s18, 15
    %p35 = por %p33, %p34
    %p36 = scmp.ne.s32.totalorder %s28, %s31
    %p37 = scmp.eq.s32.totalorder %s18, 0
    %p38 = por %p36, %p37
    %p39 = scmp.ne.s32.totalorder %s28, %s31
    %p40 = scmp.eq.s32.totalorder %s23, 15
    %p41 = por %p39, %p40
    %p42 = scmp.ne.s32.totalorder %s31, %s32
    %p43 = scmp.eq.s32.totalorder %s23, 0
    %p44 = por %p42, %p43
    %p45 = scmp.ne.s32.totalorder %s31, %s32
    %p46 = scmp.eq.s32.totalorder %s24, 15
    %p47 = por %p45, %p46
    %p49 = scmp.ne.s32.totalorder %s32, %s48
    %p50 = scmp.eq.s32.totalorder %s24, 0
    %p51 = por %p49, %p50
    %s52 = sld [smem:[#allocation3 + %s18]]
    %s53 = sld [smem:[#allocation3 + %s25]]
    %s54 = ssub.s32 %s52, %s53
    %p55 = scmp.eq.s32.totalorder %s54, 0
    %s57 = sadd.s32 %s56, 1
    %s58 = scalar_select %p55, %s56, %s57
    %p61 = pneg %p55
    %p62 = scmp.eq.s32.totalorder %s18, 15
    %p63 = por %p61, %p62
    %p64 = scmp.ne.s32.totalorder %s56, %s59
    %p65 = scmp.eq.s32.totalorder %s18, 0
    %p66 = por %p64, %p65
    %p67 = scmp.ne.s32.totalorder %s56, %s59
    %p68 = scmp.eq.s32.totalorder %s23, 15
    %p69 = por %p67, %p68
    %p70 = scmp.ne.s32.totalorder %s59, %s60
    %p71 = scmp.eq.s32.totalorder %s23, 0
    %p72 = por %p70, %p71
    %p73 = scmp.ne.s32.totalorder %s59, %s60
    %p74 = scmp.eq.s32.totalorder %s24, 15
    %p75 = por %p73, %p74
    %p77 = scmp.ne.s32.totalorder %s60, %s76
    %p78 = scmp.eq.s32.totalorder %s24, 0
    %p79 = por %p77, %p78
    %s80 = ssub.s32 %s18, %s25
    %p81 = scmp.eq.s32.totalorder %s80, 0
    %s83 = sadd.s32 %s82, 1
    %s84 = scalar_select %p81, %s82, %s83
    %p87 = pneg %p81
    %p88 = scmp.eq.s32.totalorder %s18, 15
    %p89 = por %p87, %p88
    %p90 = scmp.ne.s32.totalorder %s82, %s85
    %p91 = scmp.eq.s32.totalorder %s18, 0
    %p92 = por %p90, %p91
    %p93 = scmp.ne.s32.totalorder %s82, %s85
    %p94 = scmp.eq.s32.totalorder %s23, 15
    %p95 = por %p93, %p94
    %p96 = scmp.ne.s32.totalorder %s85, %s86
    %p97 = scmp.eq.s32.totalorder %s23, 0
    %p98 = por %p96, %p97
    %p99 = scmp.ne.s32.totalorder %s85, %s86
    %p100 = scmp.eq.s32.totalorder %s24, 15
    %p101 = por %p99, %p100
    %p103 = scmp.ne.s32.totalorder %s86, %s102
    %p104 = scmp.eq.s32.totalorder %s24, 0
    %p105 = por %p103, %p104
    %s106 = ssub.s32 %s18, %s25
    %p107 = scmp.eq.s32.totalorder %s106, 0
    %s109 = sadd.s32 %s108, 1
    %s110 = scalar_select %p107, %s108, %s109
    %p113 = pneg %p107
    %p114 = scmp.eq.s32.totalorder %s18, 15
    %p115 = por %p113, %p114
    %p116 = scmp.ne.s32.totalorder %s108, %s111
    %p117 = scmp.eq.s32.totalorder %s18, 0
    %p118 = por %p116, %p117
    %p119 = scmp.ne.s32.totalorder %s108, %s111
    %p120 = scmp.eq.s32.totalorder %s23, 15
    %p121 = por %p119, %p120
    %p122 = scmp.ne.s32.totalorder %s111, %s112
    %p123 = scmp.eq.s32.totalorder %s23, 0
    %p124 = por %p122, %p123
    %p125 = scmp.ne.s32.totalorder %s111, %s112
    %p126 = scmp.eq.s32.totalorder %s24, 15
    %p127 = por %p125, %p126
    %p129 = scmp.ne.s32.totalorder %s112, %s128
    %p130 = scmp.eq.s32.totalorder %s24, 0
    %p131 = por %p129, %p130
    %p132 = scmp.le.s32.totalorder 1, %s18
    %p133 = scmp.lt.s32.totalorder %s18, 17
    %p134 = pnand %p132, %p133
    %p135 = pneg %p134
    // Predicated region
    $region9: #{moe_block_forward.1} parent=5 // pred_check
      _
    $region10: #{moe_block_forward.1} parent=5 // pred_check_branch
      %137 = sbr.rel (%p134) target = $region12
    $region11: #{moe_block_forward.1} parent=5 // pred_region
      %s138 = ssub.s32 %s18, 1
    $region12: #{moe_block_forward.1} parent=5 // pred_fallthru
      _
    %p139 = scmp.lt.s32.totalorder %s18, 16
    // Predicated region
    $region13: #{moe_block_forward.1} parent=5 // pred_check
      %p140 = pneg %p139
    $region14: #{moe_block_forward.1} parent=5 // pred_check_branch
      %142 = sbr.rel (%p140) target = $region16
    $region15: #{moe_block_forward.1} parent=5 // pred_region
      // Predicated region
      $region17: #{moe_block_forward.1} parent=15 // pred_check
        %p143 = pneg %p38
      $region18: #{moe_block_forward.1} parent=15 // pred_check_branch
        %145 = sbr.rel (%p143) target = $region20
      $region19: #{moe_block_forward.1} parent=15 // pred_region
        %s146 = smul.u32 2, %s18
        %p147 = scmp.lt.s32.totalorder %s146, 31
        %s148 = scalar_select %p147, %s146, 31
        %s149 = smul.addr %s148, 8
        %s150 = scalar_lea.vmem %s1, %s149
        %s151 = smul.u32 2, %s18
      $region20: #{moe_block_forward.1} parent=15 // pred_fallthru
        _
      // Predicated region
      $region21: #{moe_block_forward.1} parent=15 // pred_check
        %p152 = pneg %p66
      $region22: #{moe_block_forward.1} parent=15 // pred_check_branch
        %154 = sbr.rel (%p152) target = $region24
      $region23: #{moe_block_forward.1} parent=15 // pred_region
        %s155 = sld [smem:[#allocation3 + %s18]]
        %p156 = scmp.lt.s32.totalorder %s155, 7
        %s157 = scalar_select %p156, %s155, 7
        %s158 = smul.addr %s157, 16
        %s159 = smul.addr %s158, 8
        %s160 = scalar_lea.vmem %s2, %s159
        %s161 = sld [smem:[#allocation3 + %s18]]
      $region24: #{moe_block_forward.1} parent=15 // pred_fallthru
        _
      // Predicated region
      $region25: #{moe_block_forward.1} parent=15 // pred_check
        %p162 = pneg %p92
      $region26: #{moe_block_forward.1} parent=15 // pred_check_branch
        %164 = sbr.rel (%p162) target = $region28
      $region27: #{moe_block_forward.1} parent=15 // pred_region
        %s165 = smul.u32 2, %s18
        %p166 = scmp.lt.s32.totalorder %s165, 31
        %s167 = scalar_select %p166, %s165, 31
        %s168 = smul.addr %s167, 8
        %s169 = scalar_lea.vmem %s3, %s168
        %s170 = smul.u32 2, %s18
      $region28: #{moe_block_forward.1} parent=15 // pred_fallthru
        _
    $region16: #{moe_block_forward.1} parent=5 // pred_fallthru
      _
    %p171 = scmp.le.s32.totalorder 1, %s18
    %p172 = scmp.lt.s32.totalorder %s18, 17
    %p173 = pnand %p171, %p172
    %p174 = pneg %p173
    // Predicated region
    $region29: #{moe_block_forward.1} parent=5 // pred_check
      _
    $region30: #{moe_block_forward.1} parent=5 // pred_check_branch
      %176 = sbr.rel (%p173) target = $region32
    $region31: #{moe_block_forward.1} parent=5 // pred_region
      %s177 = ssub.s32 %s18, 1
      %s178 = smul.u32 2, %s23
      %p179 = scmp.lt.s32.totalorder %s178, 31
      %s180 = scalar_select %p179, %s178, 31
      %s181 = smul.addr %s180, 8
      %s182 = scalar_lea.vmem %s1, %s181
      %p183 = pneg %p44
      %p184 = pneg %p41
      %s185 = sld [smem:[#allocation3 + %s23]]
      %p186 = scmp.lt.s32.totalorder %s185, 7
      %s187 = scalar_select %p186, %s185, 7
      %s188 = smul.addr %s187, 16
      %s189 = smul.addr %s188, 8
      %s190 = scalar_lea.vmem %s2, %s189
      %p191 = pneg %p72
      %p192 = pneg %p69
      %s193 = smul.u32 2, %s23
      %p194 = scmp.lt.s32.totalorder %s193, 31
      %s195 = scalar_select %p194, %s193, 31
      %s196 = smul.addr %s195, 8
      %s197 = scalar_lea.vmem %s3, %s196
      %p198 = pneg %p98
      %p199 = pneg %p95
      %p200 = pneg %p124
      %p201 = pneg %p121
      %s202 = smul.u32 2, %s23
      %p203 = scmp.lt.s32.totalorder %s202, 31
      %s204 = scalar_select %p203, %s202, 31
      %s205 = smul.addr %s204, 8
      %s206 = scalar_lea.vmem %s4, %s205
      %s207 = smul.u32 2, %s23
      %p208 = scmp.lt.s32.totalorder %s207, 31
      %s209 = scalar_select %p208, %s207, 31
      %s210 = smul.addr %s209, 8
      %s211 = scalar_lea.vmem %s1, %s210
      %s212 = smul.u32 2, %s23
      %s213 = sld [smem:[#allocation3 + %s23]]
      %p214 = scmp.lt.s32.totalorder %s213, 7
      %s215 = scalar_select %p214, %s213, 7
      %s216 = smul.addr %s215, 16
      %s217 = smul.addr %s216, 8
      %s218 = scalar_lea.vmem %s2, %s217
      %s219 = sld [smem:[#allocation3 + %s23]]
      %s220 = smul.u32 2, %s23
      %p221 = scmp.lt.s32.totalorder %s220, 31
      %s222 = scalar_select %p221, %s220, 31
      %s223 = smul.addr %s222, 8
      %s224 = scalar_lea.vmem %s3, %s223
      %s225 = smul.u32 2, %s23
      %s226 = smul.u32 2, %s23
      %p227 = scmp.lt.s32.totalorder %s226, 31
      %s228 = scalar_select %p227, %s226, 31
      %s229 = smul.addr %s228, 8
      %s230 = scalar_lea.vmem %s4, %s229
      %s231 = smul.u32 2, %s23
      %v232 = vld [vmem:[%s211] sm:$0xff]
      %v233 = vld [vmem:[%s211 + $0x8] sm:$0xff]
      %v234 = vld [vmem:[%s218] sm:$0xff]
      %v235 = vld [vmem:[%s218 + $0x8] sm:$0xff]
      %v236 = vld [vmem:[%s218 + $0x10] sm:$0xff]
      %v237 = vld [vmem:[%s218 + $0x18] sm:$0xff]
      %v238 = vld [vmem:[%s218 + $0x20] sm:$0xff]
      %v239 = vld [vmem:[%s218 + $0x28] sm:$0xff]
      %v240 = vld [vmem:[%s218 + $0x30] sm:$0xff]
      %v241 = vld [vmem:[%s218 + $0x38] sm:$0xff]
      %v242 = vld [vmem:[%s218 + $0x40] sm:$0xff]
      %v243 = vld [vmem:[%s218 + $0x48] sm:$0xff]
      %v244 = vld [vmem:[%s218 + $0x50] sm:$0xff]
      %v245 = vld [vmem:[%s218 + $0x58] sm:$0xff]
      %v246 = vld [vmem:[%s218 + $0x60] sm:$0xff]
      %v247 = vld [vmem:[%s218 + $0x68] sm:$0xff]
      %v248 = vld [vmem:[%s218 + $0x70] sm:$0xff]
      %v249 = vld [vmem:[%s218 + $0x78] sm:$0xff]
      %250 = vmatpush.msra.mxu0 %v249
      %251 = vmatpush.msra.mxu0 %v248
      %252 = vmatpush.msra.mxu0 %v247
      %253 = vmatpush.msra.mxu0 %v246
      %254 = vmatpush.msra.mxu0 %v245
      %255 = vmatpush.msra.mxu0 %v244
      %256 = vmatpush.msra.mxu0 %v243
      %257 = vmatpush.msra.mxu0 %v242
      %258 = vmatpush.msra.mxu0 %v241
      %259 = vmatpush.msra.mxu0 %v240
      %260 = vmatpush.msra.mxu0 %v239
      %261 = vmatpush.msra.mxu0 %v238
      %262 = vmatpush.msra.mxu0 %v237
      %263 = vmatpush.msra.mxu0 %v236
      %264 = vmatpush.msra.mxu0 %v235
      %265 = vmatpush.msra.mxu0 %v234
      %266 = vmatmul.f32.gmra.mxu0 %v232
      %v267 = vpop.f32.mrf.mxu0
      %v268 = vadd.f32 0.0, %v267
      %269 = vmatmul.f32.gmra.mxu0 %v233
      %v270 = vpop.f32.mrf.mxu0
      %v271 = vadd.f32 0.0, %v270
      %272 = vdwg.mxu0
      %v273 = vld [vmem:[%s224] sm:$0xff]
      %v274 = vld [vmem:[%s224 + $0x8] sm:$0xff]
      %276 = vset.pattern.permute.xlu0 0
      %277 = vperm.xlu0 %276, %v273
      %v278 = vpop.permute.xlu0 %277
      %281 = vset.pattern.permute.xlu0 0
      %282 = vperm.xlu0 %281, %v274
      %v283 = vpop.permute.xlu0 %282
      %v285 = vmul.f32 %v278, %v268
      %v286 = vmul.f32 %v283, %v271
      %287 = vst [vmem:[%s230] sm:$0xff] %v285
      %288 = vst [vmem:[%s230 + $0x8] sm:$0xff] %v286
      %s289 = smul.u32 2, %s23
      %p290 = scmp.lt.s32.totalorder %s289, 31
      %s291 = scalar_select %p290, %s289, 31
      %s292 = smul.addr %s291, 8
      %s293 = scalar_lea.vmem %s4, %s292
      // Predicated region
      $region33: #{moe_block_forward.1} parent=31 // pred_check
        %p294 = pneg %p121
      $region34: #{moe_block_forward.1} parent=31 // pred_check_branch
        %296 = sbr.rel (%p294) target = $region36
      $region35: #{moe_block_forward.1} parent=31 // pred_region
        %s297 = smul.u32 2, %s23
      $region36: #{moe_block_forward.1} parent=31 // pred_fallthru
        _
    $region32: #{moe_block_forward.1} parent=5 // pred_fallthru
      _
    %p298 = scmp.le.s32.totalorder 2, %s18
    // Predicated region
    $region37: #{moe_block_forward.1} parent=5 // pred_check
      %p299 = pneg %p298
    $region38: #{moe_block_forward.1} parent=5 // pred_check_branch
      %301 = sbr.rel (%p299) target = $region40
    $region39: #{moe_block_forward.1} parent=5 // pred_region
      %s302 = ssub.s32 %s18, 2
      // Predicated region
      $region41: #{moe_block_forward.1} parent=39 // pred_check
        %p303 = pneg %p127
      $region42: #{moe_block_forward.1} parent=39 // pred_check_branch
        %305 = sbr.rel (%p303) target = $region44
      $region43: #{moe_block_forward.1} parent=39 // pred_region
        %s306 = smul.u32 2, %s24
        %p307 = scmp.lt.s32.totalorder %s306, 31
        %s308 = scalar_select %p307, %s306, 31
        %s309 = smul.addr %s308, 8
        %s310 = scalar_lea.vmem %s4, %s309
      $region44: #{moe_block_forward.1} parent=39 // pred_fallthru
        _
    $region40: #{moe_block_forward.1} parent=5 // pred_fallthru
      _
  $region6: #{moe_block_forward.1} parent=0 // loop_footer
    %s22 = sadd.s32 1, %s18
  $region7: #{moe_block_forward.1} parent=0 // loop_footer_branch
    %17 = sbr.rel target = $region3
  $region8: #{moe_block_forward.1} parent=0 // loop_exit
    _

</llo_original>
